<compile_context>
chip_gen: v5e
topology: v5e:2x2
jax: 0.10.0
libtpu: 0.0.40
codegen_flags: <defaults>
</compile_context>

<pallas_src>
import numpy as np
import jax
import jax.numpy as jnp
from jax.experimental import pallas as pl
from jax.experimental.pallas import tpu as pltpu

EPS = 1e-5

# ---------------------------------------------------------------------------
# Irreps definition: "32x0e + 16x1o + 8x2e"  -> dim = 32 + 48 + 40 = 120, num_irreps = 56
# ---------------------------------------------------------------------------
IRREPS = [(32, 0), (16, 1), (8, 2)]          # (multiplicity, l)
DIM = sum(mul * (2 * l + 1) for mul, l in IRREPS)
NUM_IRREPS = sum(mul for mul, _ in IRREPS)


def build_segment_matrix():
    """S[d, u] = 1.0 iff feature component d belongs to irrep instance u."""
    S = np.zeros((DIM, NUM_IRREPS), dtype=np.float32)
    d = 0
    u = 0
    for mul, l in IRREPS:
        w = 2 * l + 1
        for _ in range(mul):
            S[d:d + w, u] = 1.0
            d += w
            u += 1
    assert d == DIM and u == NUM_IRREPS
    return S


def _round_up(n, m):
    return ((n + m - 1) // m) * m


# ---------------------------------------------------------------------------
# Pallas kernel: invariant (segment sum-of-squares) -> gated activation -> scalar mul
# ---------------------------------------------------------------------------
def gate_kernel(x_ref, seg_ref, segt_ref, o_ref):
    x = x_ref[...].astype(jnp.float32)           # (TN, DIM)
    seg = seg_ref[...]                           # (DIM, NUM_IRREPS), bf16 0/1
    segt = segt_ref[...]                         # (NUM_IRREPS, DIM), bf16 0/1

    # Per-instance squared norm: exact segment sum via MXU. Square in f32, round the
    # operand once to bf16 (single-pass MXU), accumulate in f32.
    sq = (x * x).astype(jnp.bfloat16)
    norm_sq = jnp.dot(sq, seg, preferred_element_type=jnp.float32)      # (TN, K)
    inv = jnp.sqrt(norm_sq + EPS * EPS) - EPS                           # >= 0

    # silu(v)/v == sigmoid(v)  (devide_x=True activation, refine=False).
    # inv >= 0 so exp(-inv) in (0, 1]; approx reciprocal stays on the EUP slot.
    s = pl.reciprocal(1.0 + jnp.exp(-inv), approx=True)                 # (TN, K)

    # Broadcast the per-instance scalar back over its components (pre-transposed 0/1
    # matrix, bf16 operands, f32 accumulation), then elementwise multiply.
    s_full = jnp.dot(s.astype(jnp.bfloat16), segt,
                     preferred_element_type=jnp.float32)                # (TN, DIM)
    o_ref[...] = (x * s_full).astype(o_ref.dtype)


def gate_forward(x, seg, segt, *, block_n=4096):
    """x: (N, DIM). seg: (DIM, K) bf16 0/1. segt: (K, DIM) bf16 0/1. Returns (N, DIM)."""
    N, D = x.shape
    assert D == DIM
    assert seg.shape == (DIM, NUM_IRREPS) and segt.shape == (NUM_IRREPS, DIM)

    # Row tile: multiple of 16 (covers bf16's (16,128) min tile as well as f32's (8,128)),
    # never larger than needed. Ragged N -> Pallas partial edge block; no wrapper-side
    # padding or output slicing (each would be a full extra HBM pass over x / out).
    mult = 16
    bn = min(block_n, max(mult, _round_up(N, mult)))
    bn = _round_up(bn, mult)
    grid_n = pl.cdiv(N, bn)

    itemsize = jnp.dtype(x.dtype).itemsize
    cost = pl.CostEstimate(
        flops=4 * N * DIM * NUM_IRREPS,                  # two (TN,D)x(D,K)-class matmuls
        transcendentals=2 * N * NUM_IRREPS,              # sqrt + exp per irrep instance
        bytes_accessed=2 * N * DIM * itemsize + 2 * DIM * NUM_IRREPS * 2,
    )

    out = pl.pallas_call(
        gate_kernel,
        out_shape=jax.ShapeDtypeStruct((N, D), x.dtype),
        grid_spec=pltpu.PrefetchScalarGridSpec(
            num_scalar_prefetch=0,
            grid=(grid_n,),
            in_specs=[
                # NOTE: bump to pipeline_mode=pl.Buffered(3) only if xprof shows exposed
                # DMA at step boundaries for the chosen tile size.
                pl.BlockSpec((bn, DIM), lambda i: (i, 0)),
                pl.BlockSpec((DIM, NUM_IRREPS), lambda i: (0, 0)),   # resident, tiny
                pl.BlockSpec((NUM_IRREPS, DIM), lambda i: (0, 0)),   # resident, tiny
            ],
            out_specs=pl.BlockSpec((bn, DIM), lambda i: (i, 0)),
        ),
        compiler_params=pltpu.CompilerParams(
            dimension_semantics=("parallel",),
            # ~13 MiB actually used at bn=4096 f32 (I/O double-buffers + f32/bf16
            # temporaries sq/norm_sq/s/s_full); 32 MiB raises the v5e 16 MiB scoped
            # default and still fits v7x (32 MiB scoped default / 64 MiB physical).
            vmem_limit_bytes=32 * 1024 * 1024,
        ),
        cost_estimate=cost,
    )(x, seg, segt)
    return out


# ---------------------------------------------------------------------------
# Pure-JAX reference (exact f32 math, no Pallas) for a sanity check.
# ---------------------------------------------------------------------------
def gate_reference(x, seg_f32):
    xf = x.astype(jnp.float32)
    norm_sq = (xf * xf) @ seg_f32
    inv = jnp.sqrt(norm_sq + EPS * EPS) - EPS
    s = jax.nn.sigmoid(inv)
    return (xf * (s @ seg_f32.T)).astype(x.dtype)


if __name__ == "__main__":
    key = jax.random.PRNGKey(0)

    seg_np = build_segment_matrix()
    seg = jnp.asarray(seg_np, dtype=jnp.bfloat16)            # 0/1: exact in bf16
    segt = jnp.asarray(seg_np.T.copy(), dtype=jnp.bfloat16)  # pre-transposed copy
    seg_f32 = jnp.asarray(seg_np)

    # Small deterministic example (N=64 atoms/nodes, DIM=120 features).
    N = 64
    x = jax.random.normal(key, (N, DIM), dtype=jnp.float32)
    out = jax.block_until_ready(gate_forward(x, seg, segt))
    ref = gate_reference(x, seg_f32)
    # bf16 matmul operands + approx reciprocal -> ~2^-9 relative rounding vs the exact
    # f32 reference; tolerance loosened accordingly.
    np.testing.assert_allclose(np.asarray(out), np.asarray(ref), rtol=2e-2, atol=1e-2)

    # Ragged N exercises the partial edge block (no wrapper-side padding / slicing).
    x2 = jax.random.normal(jax.random.PRNGKey(0), (50, DIM), dtype=jnp.float32)
    out2 = jax.block_until_ready(gate_forward(x2, seg, segt, block_n=16))
    np.testing.assert_allclose(np.asarray(out2), np.asarray(gate_reference(x2, seg_f32)),
                               rtol=2e-2, atol=1e-2)

    print("KERNEL_OK")
</pallas_src>

<mosaic_0001>
module attributes {stable_mosaic.version = 11 : i64} {
  func.func @gate_kernel(%arg0: i32, %arg1: memref<64x120xf32, #tpu.memory_space<vmem>>, %arg2: memref<120x56xbf16, #tpu.memory_space<vmem>>, %arg3: memref<56x120xbf16, #tpu.memory_space<vmem>>, %arg4: memref<64x120xf32, #tpu.memory_space<vmem>>) attributes {dimension_semantics = [#tpu.dimension_semantics<parallel>], iteration_bounds = array<i64: 1>, scalar_prefetch = 0 : i64, scratch_operands = 0 : i64, tpu.core_type = #tpu.core_type<tc>, window_params = [{transform_indices = @transform_0, window_bounds = array<i64: 64, 120>}, {pipeline_mode = #tpu.pipeline_mode<synchronous>, transform_indices = @transform_1, window_bounds = array<i64: 120, 56>}, {pipeline_mode = #tpu.pipeline_mode<synchronous>, transform_indices = @transform_2, window_bounds = array<i64: 56, 120>}, {transform_indices = @transform_3, window_bounds = array<i64: 64, 120>}]} {
    %c0 = arith.constant 0 : index
    %c0_0 = arith.constant 0 : index
    %0 = vector.load %arg1[%c0, %c0_0] : memref<64x120xf32, #tpu.memory_space<vmem>>, vector<64x120xf32>
    %c0_1 = arith.constant 0 : index
    %c0_2 = arith.constant 0 : index
    %1 = vector.load %arg2[%c0_1, %c0_2] : memref<120x56xbf16, #tpu.memory_space<vmem>>, vector<120x56xbf16>
    %c0_3 = arith.constant 0 : index
    %c0_4 = arith.constant 0 : index
    %2 = vector.load %arg3[%c0_3, %c0_4] : memref<56x120xbf16, #tpu.memory_space<vmem>>, vector<56x120xbf16>
    %3 = arith.mulf %0, %0 : vector<64x120xf32>
    %4 = arith.truncf %3 : vector<64x120xf32> to vector<64x120xbf16>
    %cst = arith.constant dense<0.000000e+00> : vector<64x56xf32>
    %5 = tpu.matmul %4, %1, %cst {dimension_numbers = #tpu.dot_dimension_numbers<[1], [0], [0], [1], [0, 0, 1, 1], [], []>} : vector<64x120xbf16>, vector<120x56xbf16>, vector<64x56xf32> -> vector<64x56xf32>
    %cst_5 = arith.constant 1.000000e-10 : f32
    %6 = vector.broadcast %cst_5 : f32 to vector<64x56xf32>
    %7 = arith.addf %5, %6 : vector<64x56xf32>
    %8 = math.sqrt %7 : vector<64x56xf32>
    %cst_6 = arith.constant 9.99999974E-6 : f32
    %9 = vector.broadcast %cst_6 : f32 to vector<64x56xf32>
    %10 = arith.subf %8, %9 : vector<64x56xf32>
    %cst_7 = arith.constant 0.000000e+00 : f32
    %11 = vector.broadcast %cst_7 : f32 to vector<64x56xf32>
    %12 = arith.subf %11, %10 : vector<64x56xf32>
    %13 = math.exp %12 : vector<64x56xf32>
    %cst_8 = arith.constant 1.000000e+00 : f32
    %14 = vector.broadcast %cst_8 : f32 to vector<64x56xf32>
    %15 = arith.addf %14, %13 : vector<64x56xf32>
    %16 = tpu.reciprocal %15 {approx = true} : vector<64x56xf32> -> vector<64x56xf32>
    %17 = arith.truncf %16 : vector<64x56xf32> to vector<64x56xbf16>
    %cst_9 = arith.constant dense<0.000000e+00> : vector<64x120xf32>
    %18 = tpu.matmul %17, %2, %cst_9 {dimension_numbers = #tpu.dot_dimension_numbers<[1], [0], [0], [1], [0, 0, 1, 1], [], []>} : vector<64x56xbf16>, vector<56x120xbf16>, vector<64x120xf32> -> vector<64x120xf32>
    %19 = arith.mulf %0, %18 : vector<64x120xf32>
    %c0_10 = arith.constant 0 : index
    %c0_11 = arith.constant 0 : index
    %20 = vector.load %arg4[%c0_10, %c0_11] : memref<64x120xf32, #tpu.memory_space<vmem>>, vector<64x120xf32>
    tpu.vector_store %arg4[%c0_10, %c0_11], %19 {strides = array<i32>} : memref<64x120xf32, #tpu.memory_space<vmem>>, vector<64x120xf32>,
    return
  }
  func.func @transform_0(%arg0: i32) -> (i32, i32) {
    %c0_i32 = arith.constant 0 : i32
    %c0_i32_0 = arith.constant 0 : i32
    return %arg0, %c0_i32 : i32, i32
  }
  func.func @transform_1(%arg0: i32) -> (i32, i32) {
    %c0_i32 = arith.constant 0 : i32
    %c0_i32_0 = arith.constant 0 : i32
    %c0_i32_1 = arith.constant 0 : i32
    return %c0_i32, %c0_i32_0 : i32, i32
  }
  func.func @transform_2(%arg0: i32) -> (i32, i32) {
    %c0_i32 = arith.constant 0 : i32
    %c0_i32_0 = arith.constant 0 : i32
    %c0_i32_1 = arith.constant 0 : i32
    return %c0_i32, %c0_i32_0 : i32, i32
  }
  func.func @transform_3(%arg0: i32) -> (i32, i32) {
    %c0_i32 = arith.constant 0 : i32
    %c0_i32_0 = arith.constant 0 : i32
    return %arg0, %c0_i32 : i32, i32
  }
}

</mosaic_0001>

<llo_original>
// kernel: tpu_custom_call.1
$region0: #{tpu_custom_call.1}
  #allocation0 [shape = 'u32[]', space=smem, size = 0x4, offset = 0x4, fixed_abs, tag = 'smem constant byte address 0x4 - core index']
  #allocation1 [shape = 'u32[72,128]{1,0:T(1,128)}', space=vmem, size = 0x9000, scoped, tag = 'internal scratch']
  %s0 = inlined_call_operand.vmem [shape: f32[64,120], index: 0, kind: input, shape index: {}]
  %s1 = inlined_call_operand.vmem [shape: bf16[120,56], index: 1, kind: input, shape index: {}]
  %s2 = inlined_call_operand.hbm [shape: bf16[56,120], index: 2, kind: input, shape index: {}]
  %s3 = inlined_call_operand.hbm [shape: f32[64,120], index: 3, kind: output, shape index: {}]
  %s4 = sld [smem:[#allocation0]]
  $region26: #{tpu_custom_call.1} parent=0
    _
  %s6 = ssub.s32 1, %s4
  %s7 = scalar_select 0, %s6, %s4
  $region1: #{tpu_custom_call.1} parent=0
    #allocation2 [shape = 'u8[14336]{0}', space=vmem, size = 0x3800, scoped, tag = 'input window, operand 2, single buffered']
    #allocation3 [shape = 's32[1]{0}', space=sflag, size = 0x4, scoped, tag = 'scoped memory for tpu_custom_call.1']
    #allocation4 [shape = 's32[1]{0}', space=sflag, size = 0x4, scoped, tag = 'scoped memory for tpu_custom_call.1']
    #allocation5 [shape = 'u8[32768]{0}', space=vmem, size = 0x8000, scoped, tag = 'output window, operand 0, single buffered']
    %8 = vsyncpa [#allocation3], 0
    %9 = vsyncpa [#allocation4], 0
    // Predicated region
    $region2: #{tpu_custom_call.1} parent=1 // pred_check
      _
    $region3: #{tpu_custom_call.1} parent=1 // pred_check_branch
      %11 = sbr.rel (0) target = $region5
    $region4: #{tpu_custom_call.1} parent=1 // pred_region
      _
    $region5: #{tpu_custom_call.1} parent=1 // pred_fallthru
      _
    // Predicated region
    $region6: #{tpu_custom_call.1} parent=1 // pred_check
      _
    $region7: #{tpu_custom_call.1} parent=1 // pred_check_branch
      %13 = sbr.rel (0) target = $region9
    $region8: #{tpu_custom_call.1} parent=1 // pred_region
      _
    $region9: #{tpu_custom_call.1} parent=1 // pred_fallthru
      _
    // Predicated region
    $region10: #{tpu_custom_call.1} parent=1 // pred_check
      _
    $region11: #{tpu_custom_call.1} parent=1 // pred_check_branch
      %15 = sbr.rel (0) target = $region13
    $region12: #{tpu_custom_call.1} parent=1 // pred_region
      %17 = vsyncadd [#allocation3], 0
      %s18 = sshll.u32 %s2, 4
      %s19 = int_to_ptr.hbm [resolvable:$true] %s18
      %s20 = sshll.u32 [#allocation2], 4
      %s21 = int_to_ptr.vmem [resolvable:$true] %s20
      %26 = dma.hbm_to_vmem [thread:$0]  %s19, 448, %s21, [#allocation3], 64, 64, 4
    $region13: #{tpu_custom_call.1} parent=1 // pred_fallthru
      _
    // Predicated region
    $region14: #{tpu_custom_call.1} parent=1 // pred_check
      _
    $region15: #{tpu_custom_call.1} parent=1 // pred_check_branch
      %28 = sbr.rel (0) target = $region17
    $region16: #{tpu_custom_call.1} parent=1 // pred_region
      %30 = dma.done [#allocation3], 448
    $region17: #{tpu_custom_call.1} parent=1 // pred_fallthru
      _
    %v32 = vld [vmem:[%s0] sm:$0xff]
    %v33 = vld [vmem:[%s0 + $0x8] sm:$0xff]
    %v34 = vld [vmem:[%s0 + $0x10] sm:$0xff]
    %v35 = vld [vmem:[%s0 + $0x18] sm:$0xff]
    %v36 = vld [vmem:[%s0 + $0x20] sm:$0xff]
    %v37 = vld [vmem:[%s0 + $0x28] sm:$0xff]
    %v38 = vld [vmem:[%s0 + $0x30] sm:$0xff]
    %v39 = vld [vmem:[%s0 + $0x38] sm:$0xff]
    %v40 = vld [vmem:[%s1] sm:$0xf]
    %v41 = vld [vmem:[%s1 + $0x4] sm:$0xf]
    %v42 = vld [vmem:[%s1 + $0x8] sm:$0xf]
    %v43 = vld [vmem:[%s1 + $0xc] sm:$0xf]
    %v44 = vld [vmem:[%s1 + $0x10] sm:$0xf]
    %v45 = vld [vmem:[%s1 + $0x14] sm:$0xf]
    %v46 = vld [vmem:[%s1 + $0x18] sm:$0xf]
    %v47 = vld [vmem:[%s1 + $0x1c] sm:$0xf]
    %v48 = vld [vmem:[%s1 + $0x20] sm:$0xf]
    %v49 = vld [vmem:[%s1 + $0x24] sm:$0xf]
    %v50 = vld [vmem:[%s1 + $0x28] sm:$0xf]
    %v51 = vld [vmem:[%s1 + $0x2c] sm:$0xf]
    %v52 = vld [vmem:[%s1 + $0x30] sm:$0xf]
    %v53 = vld [vmem:[%s1 + $0x34] sm:$0xf]
    %v54 = vld [vmem:[%s1 + $0x38] sm:$0xf]
    %v55 = vld [vmem:[#allocation2] sm:$0xf]
    %v56 = vld [vmem:[#allocation2 + $0x4] sm:$0xf]
    %v57 = vld [vmem:[#allocation2 + $0x8] sm:$0xf]
    %v58 = vld [vmem:[#allocation2 + $0xc] sm:$0xf]
    %v59 = vld [vmem:[#allocation2 + $0x10] sm:$0xf]
    %v60 = vld [vmem:[#allocation2 + $0x14] sm:$0xf]
    %v61 = vld [vmem:[#allocation2 + $0x18] sm:$0xf]
    %v62 = vmul.f32 %v32, %v32
    %v63 = vmul.f32 %v33, %v33
    %v64 = vmul.f32 %v34, %v34
    %v65 = vmul.f32 %v35, %v35
    %v66 = vmul.f32 %v36, %v36
    %v67 = vmul.f32 %v37, %v37
    %v68 = vmul.f32 %v38, %v38
    %v69 = vmul.f32 %v39, %v39
    %v70 = vpack.c.bf16 %v63, %v62
    %v71 = vpack.c.bf16 %v65, %v64
    %v72 = vpack.c.bf16 %v67, %v66
    %v73 = vpack.c.bf16 %v69, %v68
    %v89 = vunpack.c.l.b16 %v40
    %v90 = vunpack.c.l.b16 %v41
    %v91 = vunpack.c.l.b16 %v42
    %v92 = vunpack.c.l.b16 %v43
    %v93 = vunpack.c.l.b16 %v44
    %v94 = vunpack.c.l.b16 %v45
    %v95 = vunpack.c.l.b16 %v46
    %v96 = vunpack.c.l.b16 %v47
    %v97 = vunpack.c.l.b16 %v48
    %v98 = vunpack.c.l.b16 %v49
    %v99 = vunpack.c.l.b16 %v50
    %v100 = vunpack.c.l.b16 %v51
    %v101 = vunpack.c.l.b16 %v52
    %v102 = vunpack.c.l.b16 %v53
    %v103 = vunpack.c.l.b16 %v54
    %v104 = vpack.c.b16 %v90, %v89
    %v105 = vpack.c.b16 %v92, %v91
    %v106 = vpack.c.b16 %v94, %v93
    %v107 = vpack.c.b16 %v96, %v95
    %v108 = vpack.c.b16 %v98, %v97
    %v109 = vpack.c.b16 %v100, %v99
    %v110 = vpack.c.b16 %v102, %v101
    %v111 = vpack.c.b16 %v103, %v103
    %vm119 = vcmask 982016
    %v121 = vsel %vm119, %v70, 0
    %v124 = vsel %vm119, %v71, 0
    %v127 = vsel %vm119, %v72, 0
    %v130 = vsel %vm119, %v73, 0
    %vm132 = vcmask 1043456
    %v134 = vsel %vm132, %v111, 0
    %136 = vmatpush.bf16.msra.mxu0 %v134
    %137 = vmatpush.bf16.msra.mxu0 %v110
    %138 = vmatpush.bf16.msra.mxu0 %v109
    %139 = vmatpush.bf16.msra.mxu0 %v108
    %140 = vmatpush.bf16.msra.mxu0 %v107
    %141 = vmatpush.bf16.msra.mxu0 %v106
    %142 = vmatpush.bf16.msra.mxu0 %v105
    %143 = vmatpush.bf16.msra.mxu0 %v104
    %144 = vmatmul.bf16.gmra.mxu0 %v121
    %v145 = vpop.f32.mrf.mxu0
    %v146 = vadd.f32 1e-10, %v145
    %v147 = vpop.f32.mrf.mxu0
    %v148 = vadd.f32 1e-10, %v147
    %149 = vmatmul.bf16.gmra.mxu0 %v124
    %v150 = vpop.f32.mrf.mxu0
    %v151 = vadd.f32 1e-10, %v150
    %v152 = vpop.f32.mrf.mxu0
    %v153 = vadd.f32 1e-10, %v152
    %154 = vmatmul.bf16.gmra.mxu0 %v127
    %v155 = vpop.f32.mrf.mxu0
    %v156 = vadd.f32 1e-10, %v155
    %v157 = vpop.f32.mrf.mxu0
    %v158 = vadd.f32 1e-10, %v157
    %159 = vmatmul.bf16.gmra.mxu0 %v130
    %v160 = vpop.f32.mrf.mxu0
    %v161 = vadd.f32 1e-10, %v160
    %v162 = vpop.f32.mrf.mxu0
    %v163 = vadd.f32 1e-10, %v162
    %164 = vdwg.mxu0
    %v165 = vrsqrt.pop %v146
    %v166 = vmul.f32 %v165, %v146
    %v167 = vmul.f32 %v166, %v165
    %v168 = vmul.f32 0.5, %v167
    %v169 = vsub.f32 1.5, %v168
    %v170 = vmul.f32 %v165, %v169
    %v171 = vmul.f32 %v146, %v170
    %vm172 = vcmp.eq.f32.partialorder %v146, inf
    %v173 = vsel %vm172, %v146, %v171
    %vm174 = vcmp.eq.f32.partialorder %v146, 0.0
    %v175 = vand.u32 %v146, 2147483648
    %v176 = vsel %vm174, %v175, %v173
    %v177 = vrsqrt.pop %v148
    %v178 = vmul.f32 %v177, %v148
    %v179 = vmul.f32 %v178, %v177
    %v180 = vmul.f32 0.5, %v179
    %v181 = vsub.f32 1.5, %v180
    %v182 = vmul.f32 %v177, %v181
    %v183 = vmul.f32 %v148, %v182
    %vm184 = vcmp.eq.f32.partialorder %v148, inf
    %v185 = vsel %vm184, %v148, %v183
    %vm186 = vcmp.eq.f32.partialorder %v148, 0.0
    %v187 = vand.u32 %v148, 2147483648
    %v188 = vsel %vm186, %v187, %v185
    %v189 = vrsqrt.pop %v151
    %v190 = vmul.f32 %v189, %v151
    %v191 = vmul.f32 %v190, %v189
    %v192 = vmul.f32 0.5, %v191
    %v193 = vsub.f32 1.5, %v192
    %v194 = vmul.f32 %v189, %v193
    %v195 = vmul.f32 %v151, %v194
    %vm196 = vcmp.eq.f32.partialorder %v151, inf
    %v197 = vsel %vm196, %v151, %v195
    %vm198 = vcmp.eq.f32.partialorder %v151, 0.0
    %v199 = vand.u32 %v151, 2147483648
    %v200 = vsel %vm198, %v199, %v197
    %v201 = vrsqrt.pop %v153
    %v202 = vmul.f32 %v201, %v153
    %v203 = vmul.f32 %v202, %v201
    %v204 = vmul.f32 0.5, %v203
    %v205 = vsub.f32 1.5, %v204
    %v206 = vmul.f32 %v201, %v205
    %v207 = vmul.f32 %v153, %v206
    %vm208 = vcmp.eq.f32.partialorder %v153, inf
    %v209 = vsel %vm208, %v153, %v207
    %vm210 = vcmp.eq.f32.partialorder %v153, 0.0
    %v211 = vand.u32 %v153, 2147483648
    %v212 = vsel %vm210, %v211, %v209
    %v213 = vrsqrt.pop %v156
    %v214 = vmul.f32 %v213, %v156
    %v215 = vmul.f32 %v214, %v213
    %v216 = vmul.f32 0.5, %v215
    %v217 = vsub.f32 1.5, %v216
    %v218 = vmul.f32 %v213, %v217
    %v219 = vmul.f32 %v156, %v218
    %vm220 = vcmp.eq.f32.partialorder %v156, inf
    %v221 = vsel %vm220, %v156, %v219
    %vm222 = vcmp.eq.f32.partialorder %v156, 0.0
    %v223 = vand.u32 %v156, 2147483648
    %v224 = vsel %vm222, %v223, %v221
    %v225 = vrsqrt.pop %v158
    %v226 = vmul.f32 %v225, %v158
    %v227 = vmul.f32 %v226, %v225
    %v228 = vmul.f32 0.5, %v227
    %v229 = vsub.f32 1.5, %v228
    %v230 = vmul.f32 %v225, %v229
    %v231 = vmul.f32 %v158, %v230
    %vm232 = vcmp.eq.f32.partialorder %v158, inf
    %v233 = vsel %vm232, %v158, %v231
    %vm234 = vcmp.eq.f32.partialorder %v158, 0.0
    %v235 = vand.u32 %v158, 2147483648
    %v236 = vsel %vm234, %v235, %v233
    %v237 = vrsqrt.pop %v161
    %v238 = vmul.f32 %v237, %v161
    %v239 = vmul.f32 %v238, %v237
    %v240 = vmul.f32 0.5, %v239
    %v241 = vsub.f32 1.5, %v240
    %v242 = vmul.f32 %v237, %v241
    %v243 = vmul.f32 %v161, %v242
    %vm244 = vcmp.eq.f32.partialorder %v161, inf
    %v245 = vsel %vm244, %v161, %v243
    %vm246 = vcmp.eq.f32.partialorder %v161, 0.0
    %v247 = vand.u32 %v161, 2147483648
    %v248 = vsel %vm246, %v247, %v245
    %v249 = vrsqrt.pop %v163
    %v250 = vmul.f32 %v249, %v163
    %v251 = vmul.f32 %v250, %v249
    %v252 = vmul.f32 0.5, %v251
    %v253 = vsub.f32 1.5, %v252
    %v254 = vmul.f32 %v249, %v253
    %v255 = vmul.f32 %v163, %v254
    %vm256 = vcmp.eq.f32.partialorder %v163, inf
    %v257 = vsel %vm256, %v163, %v255
    %vm258 = vcmp.eq.f32.partialorder %v163, 0.0
    %v259 = vand.u32 %v163, 2147483648
    %v260 = vsel %vm258, %v259, %v257
    %v261 = vsub.f32 %v176, 1e-05
    %v262 = vsub.f32 %v188, 1e-05
    %v263 = vsub.f32 %v200, 1e-05
    %v264 = vsub.f32 %v212, 1e-05
    %v265 = vsub.f32 %v224, 1e-05
    %v266 = vsub.f32 %v236, 1e-05
    %v267 = vsub.f32 %v248, 1e-05
    %v268 = vsub.f32 %v260, 1e-05
    %v269 = vsub.f32 0.0, %v261
    %v270 = vsub.f32 0.0, %v262
    %v271 = vsub.f32 0.0, %v263
    %v272 = vsub.f32 0.0, %v264
    %v273 = vsub.f32 0.0, %v265
    %v274 = vsub.f32 0.0, %v266
    %v275 = vsub.f32 0.0, %v267
    %v276 = vsub.f32 0.0, %v268
    %v277 = vmul.f32 %v269, 1.442695
    %v278 = vpow.pop %v277
    %v279 = vmul.f32 %v270, 1.442695
    %v280 = vpow.pop %v279
    %v281 = vmul.f32 %v271, 1.442695
    %v282 = vpow.pop %v281
    %v283 = vmul.f32 %v272, 1.442695
    %v284 = vpow.pop %v283
    %v285 = vmul.f32 %v273, 1.442695
    %v286 = vpow.pop %v285
    %v287 = vmul.f32 %v274, 1.442695
    %v288 = vpow.pop %v287
    %v289 = vmul.f32 %v275, 1.442695
    %v290 = vpow.pop %v289
    %v291 = vmul.f32 %v276, 1.442695
    %v292 = vpow.pop %v291
    %v293 = vadd.f32 %v278, 1.0
    %v294 = vadd.f32 %v280, 1.0
    %v295 = vadd.f32 %v282, 1.0
    %v296 = vadd.f32 %v284, 1.0
    %v297 = vadd.f32 %v286, 1.0
    %v298 = vadd.f32 %v288, 1.0
    %v299 = vadd.f32 %v290, 1.0
    %v300 = vadd.f32 %v292, 1.0
    %v301 = vrcp.pop %v293
    %v302 = vrcp.pop %v294
    %v303 = vrcp.pop %v295
    %v304 = vrcp.pop %v296
    %v305 = vrcp.pop %v297
    %v306 = vrcp.pop %v298
    %v307 = vrcp.pop %v299
    %v308 = vrcp.pop %v300
    %v309 = vpack.c.bf16 %v302, %v301
    %v310 = vpack.c.bf16 %v304, %v303
    %v311 = vpack.c.bf16 %v306, %v305
    %v312 = vpack.c.bf16 %v308, %v307
    %v320 = vunpack.c.l.b16 %v55
    %v321 = vunpack.c.l.b16 %v56
    %v322 = vunpack.c.l.b16 %v57
    %v323 = vunpack.c.l.b16 %v58
    %v324 = vunpack.c.l.b16 %v59
    %v325 = vunpack.c.l.b16 %v60
    %v326 = vunpack.c.l.b16 %v61
    %v327 = vpack.c.b16 %v321, %v320
    %v328 = vpack.c.b16 %v323, %v322
    %v329 = vpack.c.b16 %v325, %v324
    %v330 = vpack.c.b16 %v326, %v326
    %vm334 = vcmask 457728
    %v336 = vsel %vm334, %v309, 0
    %v339 = vsel %vm334, %v310, 0
    %v342 = vsel %vm334, %v311, 0
    %v345 = vsel %vm334, %v312, 0
    %v348 = vsel %vm132, %v330, 0
    %350 = vmatpush.bf16.msra.mxu0 0
    %351 = vmatpush.bf16.msra.mxu0 0
    %352 = vmatpush.bf16.msra.mxu0 0
    %353 = vmatpush.bf16.msra.mxu0 0
    %354 = vmatpush.bf16.msra.mxu0 %v348
    %355 = vmatpush.bf16.msra.mxu0 %v329
    %356 = vmatpush.bf16.msra.mxu0 %v328
    %357 = vmatpush.bf16.msra.mxu0 %v327
    %358 = vmatmul.bf16.gmra.mxu0 %v336
    %v359 = vpop.f32.mrf.mxu0
    %v360 = vadd.f32 0.0, %v359
    %v361 = vpop.f32.mrf.mxu0
    %v362 = vadd.f32 0.0, %v361
    %363 = vmatmul.bf16.gmra.mxu0 %v339
    %v364 = vpop.f32.mrf.mxu0
    %v365 = vadd.f32 0.0, %v364
    %v366 = vpop.f32.mrf.mxu0
    %v367 = vadd.f32 0.0, %v366
    %368 = vmatmul.bf16.gmra.mxu0 %v342
    %v369 = vpop.f32.mrf.mxu0
    %v370 = vadd.f32 0.0, %v369
    %v371 = vpop.f32.mrf.mxu0
    %v372 = vadd.f32 0.0, %v371
    %373 = vmatmul.bf16.gmra.mxu0 %v345
    %v374 = vpop.f32.mrf.mxu0
    %v375 = vadd.f32 0.0, %v374
    %v376 = vpop.f32.mrf.mxu0
    %v377 = vadd.f32 0.0, %v376
    %378 = vdwg.mxu0
    %v379 = vmul.f32 %v32, %v360
    %v380 = vmul.f32 %v33, %v362
    %v381 = vmul.f32 %v34, %v365
    %v382 = vmul.f32 %v35, %v367
    %v383 = vmul.f32 %v36, %v370
    %v384 = vmul.f32 %v37, %v372
    %v385 = vmul.f32 %v38, %v375
    %v386 = vmul.f32 %v39, %v377
    %387 = vst.msk [vmem:[#allocation5] sm:$0xff] %vm119, %v379
    %388 = vst.msk [vmem:[#allocation5 + $0x8] sm:$0xff] %vm119, %v380
    %389 = vst.msk [vmem:[#allocation5 + $0x10] sm:$0xff] %vm119, %v381
    %390 = vst.msk [vmem:[#allocation5 + $0x18] sm:$0xff] %vm119, %v382
    %391 = vst.msk [vmem:[#allocation5 + $0x20] sm:$0xff] %vm119, %v383
    %392 = vst.msk [vmem:[#allocation5 + $0x28] sm:$0xff] %vm119, %v384
    %393 = vst.msk [vmem:[#allocation5 + $0x30] sm:$0xff] %vm119, %v385
    %394 = vst.msk [vmem:[#allocation5 + $0x38] sm:$0xff] %vm119, %v386
    // Predicated region
    $region18: #{tpu_custom_call.1} parent=1 // pred_check
      _
    $region19: #{tpu_custom_call.1} parent=1 // pred_check_branch
      %396 = sbr.rel (0) target = $region21
    $region20: #{tpu_custom_call.1} parent=1 // pred_region
      %398 = vsyncadd [#allocation4], 0
      %s399 = sshll.u32 [#allocation5], 4
      %s400 = int_to_ptr.vmem [resolvable:$true] %s399
      %s401 = sshll.u32 %s3, 4
      %s402 = int_to_ptr.hbm [resolvable:$true] %s401
      %407 = dma.vmem_to_hbm [thread:$0]  %s400, 1024, %s402, [#allocation4], 128, 128, 8
    $region21: #{tpu_custom_call.1} parent=1 // pred_fallthru
      _
    // Predicated region
    $region22: #{tpu_custom_call.1} parent=1 // pred_check
      _
    $region23: #{tpu_custom_call.1} parent=1 // pred_check_branch
      %409 = sbr.rel (0) target = $region25
    $region24: #{tpu_custom_call.1} parent=1 // pred_region
      %411 = dma.done [#allocation4], 1024
    $region25: #{tpu_custom_call.1} parent=1 // pred_fallthru
      _
    %412 = vsyncpa [#allocation3], 1
    %413 = vsyncpa [#allocation4], 1

</llo_original>
